<compile_context>
chip_gen: v5e
topology: v5e:2x2
jax: 0.10.0
libtpu: 0.0.40
codegen_flags: <defaults>
</compile_context>

<pallas_src>
import functools

import jax
import jax.numpy as jnp
from jax.experimental import pallas as pl
from jax.experimental.pallas import tpu as pltpu


def _round_up(x: int, m: int) -> int:
    return ((x + m - 1) // m) * m


def _sublane_multiple(dtype) -> int:
    # Sub-32-bit dtypes pack along sublanes: f32 -> 8 rows, bf16 -> 16, i8/fp8 -> 32.
    return 8 * max(1, 4 // jnp.dtype(dtype).itemsize)


@functools.lru_cache(maxsize=None)
def _single_buffering_supported() -> bool:
    """Probe whether BlockSpec(pipeline_mode=pl.Buffered(1)) compiles & runs here."""
    def _copy_kernel(x_ref, o_ref):
        o_ref[...] = x_ref[...]

    try:
        spec = pl.BlockSpec((8, 128), lambda i: (0, 0),
                            pipeline_mode=pl.Buffered(buffer_count=1))
        fn = pl.pallas_call(
            _copy_kernel,
            out_shape=jax.ShapeDtypeStruct((8, 128), jnp.float32),
            grid=(1,),
            in_specs=[spec],
            out_specs=pl.BlockSpec((8, 128), lambda i: (0, 0)),
        )
        jax.block_until_ready(fn(jnp.zeros((8, 128), jnp.float32)))
        return True
    except Exception:  # any failure -> fall back to default double-buffering
        return False


def prepare_dense_residual_params(weight, bias):
    """One-time (load-time) parameter prep.

    Transposes the PyTorch (out, in) weight to the MXU-canonical (in, out)
    layout and zero-pads both features axes to a multiple of 128 lanes.
    Returns (w_t_padded: (Fp, Fp), bias_padded: (1, Fp)).
    """
    f_out, f_in = weight.shape
    assert f_out == f_in and bias.shape == (f_out,)
    fp = _round_up(f_in, 128)
    w_t = jnp.pad(weight.T, ((0, fp - f_in), (0, fp - f_out)))
    b_p = jnp.pad(bias, (0, fp - f_out)).reshape(1, fp)
    return w_t, b_p


# ----------------------------------------------------------------------------
# Kernels
# ----------------------------------------------------------------------------
def _dense_residual_kernel_fused(x_ref, w_ref, b_ref, o_ref):
    # Single output-feature block: the residual is the whole resident x tile.
    # x_ref: (tm, Kp)  w_ref: (Kp, tn=Kp)  b_ref: (1, tn)  o_ref: (tm, tn)
    x = x_ref[...]
    y = jax.lax.dot_general(                 # canonical (tm,K)x(K,tn) MXU contraction
        x, w_ref[...],
        dimension_numbers=(((1,), (0,)), ((), ())),
        preferred_element_type=jnp.float32)
    o_ref[...] = (y + b_ref[...] + x.astype(jnp.float32)).astype(o_ref.dtype)


def _dense_residual_kernel_ntiled(x_ref, xres_ref, w_ref, b_ref, o_ref):
    # Multiple output-feature blocks: the residual columns for this (i, j) tile
    # arrive as their own pipelined operand (avoids dynamic lane slicing).
    # x_ref: (tm, Kp)  xres_ref: (tm, tn)  w_ref: (Kp, tn)  b_ref: (1, tn)
    y = jax.lax.dot_general(
        x_ref[...], w_ref[...],
        dimension_numbers=(((1,), (0,)), ((), ())),
        preferred_element_type=jnp.float32)
    o_ref[...] = (y + b_ref[...] + xres_ref[...].astype(jnp.float32)).astype(o_ref.dtype)


# ----------------------------------------------------------------------------
# Tiling / wrapper
# ----------------------------------------------------------------------------
def _select_tiles(B, Kp, Np, x_itemsize, w_itemsize, sublane, w_buffers,
                  vmem_cap=40 * 1024 * 1024):
    # --- N (output-feature) tile: largest 128-multiple divisor of Np <= 512.
    # 256/512-wide tiles fully feed v6e/v7x's 256x256 MXU; 128 saturates v5e's.
    candidates = ((Np,) if Np <= 512 else ()) + (512, 384, 256, 128)
    tn_opts = []
    for t in candidates:
        if t <= Np and Np % t == 0 and t not in tn_opts:
            tn_opts.append(t)
    tn = tn_opts[-1]
    for t in tn_opts:  # largest weight tile that stays within half the budget
        if w_buffers * Kp * t * w_itemsize <= vmem_cap // 2:
            tn = t
            break

    # --- batch tile: target 512 rows (amortizes ~0.35us/grid-step overhead,
    # near-roofline DMA on v6e), rounded to the dtype's sublane packing.
    tm = max(sublane, min(512, _round_up(B, sublane)))

    def vmem_bytes(tm_, tn_):
        return (2 * tm_ * Kp * x_itemsize                   # x tile, double-buffered
                + 2 * tm_ * tn_ * x_itemsize                # residual tile (N-tiled case)
                + w_buffers * (Kp + 1) * tn_ * w_itemsize   # weight + bias tiles
                + 2 * tm_ * tn_ * x_itemsize)               # out tile, double-buffered

    while vmem_bytes(tm, tn) > vmem_cap and tm > sublane:
        tm = max(sublane, (tm // 2) // sublane * sublane)
    return tm, tn, vmem_bytes(tm, tn)


@functools.partial(jax.jit, static_argnames=("single_buf",))
def _dense_residual_call(x, w_p, b_p, *, single_buf):
    B, F = x.shape
    Kp, Np = w_p.shape                      # Kp == Np == round_up(F, 128)
    x_itemsize = jnp.dtype(x.dtype).itemsize
    w_itemsize = jnp.dtype(w_p.dtype).itemsize
    sublane = _sublane_multiple(x.dtype)
    w_buffers = 1 if single_buf else 2

    tm, tn, budget = _select_tiles(B, Kp, Np, x_itemsize, w_itemsize, sublane, w_buffers)
    num_n = Np // tn
    num_b = pl.cdiv(B, tm)
    grid = (num_n, num_b)   # N outer -> weight tile resident across inner batch steps

    # Zero-pad the feature/K axis only when it is not lane-aligned.  The batch
    # axis is never padded: the last partial block's OOB rows are garbage on
    # read and dropped on write (rows are independent), so no pad/slice copy.
    x_in = x if Kp == F else jnp.pad(x, ((0, 0), (0, Kp - F)))

    wb_kwargs = {"pipeline_mode": pl.Buffered(buffer_count=1)} if single_buf else {}
    x_spec = pl.BlockSpec((tm, Kp), lambda j, i: (i, 0))
    w_spec = pl.BlockSpec((Kp, tn), lambda j, i: (0, j), **wb_kwargs)
    b_spec = pl.BlockSpec((1, tn), lambda j, i: (0, j), **wb_kwargs)
    o_spec = pl.BlockSpec((tm, tn), lambda j, i: (i, j))

    if num_n == 1:
        kernel = _dense_residual_kernel_fused
        in_specs = [x_spec, w_spec, b_spec]
        operands = (x_in, w_p, b_p)
        xres_bytes = 0
    else:
        kernel = _dense_residual_kernel_ntiled
        in_specs = [x_spec, pl.BlockSpec((tm, tn), lambda j, i: (i, j)), w_spec, b_spec]
        operands = (x_in, x_in, w_p, b_p)
        xres_bytes = B * Np * x_itemsize

    cost = pl.CostEstimate(
        flops=2 * B * Kp * Np + 2 * B * Np,
        transcendentals=0,
        bytes_accessed=(num_n * B * Kp * x_itemsize + xres_bytes
                        + Kp * Np * w_itemsize + Np * w_itemsize
                        + B * Np * x_itemsize),
    )

    vmem_limit = int(min(max(2 * budget, 32 * 1024 * 1024), 64 * 1024 * 1024))

    # NOTE: input_output_aliases={0: 0} would drop the extra (B, F) HBM output
    # buffer, but is only safe when x is never re-read after its columns are
    # written (num_n == 1, no K padding, donatable x); skipped for generality.
    out_p = pl.pallas_call(
        kernel,
        out_shape=jax.ShapeDtypeStruct((B, Np), x.dtype),
        grid_spec=pltpu.PrefetchScalarGridSpec(
            num_scalar_prefetch=0,
            grid=grid,
            in_specs=in_specs,
            out_specs=o_spec,
        ),
        compiler_params=pltpu.CompilerParams(
            dimension_semantics=("parallel", "parallel"),
            vmem_limit_bytes=vmem_limit,
        ),
        cost_estimate=cost,
    )(*operands)

    return out_p if Np == F else out_p[:, :F]


def dense_residual_layer(x, w_prepared, b_prepared):
    """f(x) = x @ W^T + b + x, with (w_prepared, b_prepared) from prepare_dense_residual_params."""
    B, F = x.shape
    fp = _round_up(F, 128)
    assert w_prepared.shape == (fp, fp) and b_prepared.shape == (1, fp)
    single_buf = _single_buffering_supported()   # probed once, outside the jitted call
    return _dense_residual_call(x, w_prepared, b_prepared, single_buf=single_buf)


if __name__ == "__main__":
    key = jax.random.PRNGKey(0)
    batch, num_features = 8, 32

    kx, kw, kb = jax.random.split(key, 3)
    x = jax.random.normal(kx, (batch, num_features), dtype=jnp.float32)
    # nn.Linear-style init: weight (out, in), bias (out,)
    bound = 1.0 / (num_features ** 0.5)
    weight = jax.random.uniform(kw, (num_features, num_features),
                                dtype=jnp.float32, minval=-bound, maxval=bound)
    bias = jax.random.uniform(kb, (num_features,),
                              dtype=jnp.float32, minval=-bound, maxval=bound)

    # One-time parameter prep (transpose + lane padding) — load-time, not per-call.
    w_prep, b_prep = prepare_dense_residual_params(weight, bias)

    out = dense_residual_layer(x, w_prep, b_prep)
    out = jax.block_until_ready(out)

    # Reference check in plain JAX.
    ref = x @ weight.T + bias + x
    assert out.shape == ref.shape, "shape mismatch vs reference"
    assert jnp.allclose(out, ref, atol=1e-5, rtol=1e-5), "mismatch vs reference"

    print("KERNEL_OK")
</pallas_src>

<mosaic_0001>
module attributes {stable_mosaic.version = 11 : i64} {
  func.func @_copy_kernel(%arg0: i32, %arg1: memref<8x128xf32, #tpu.memory_space<vmem>>, %arg2: memref<8x128xf32, #tpu.memory_space<vmem>>) attributes {dimension_semantics = [#tpu.dimension_semantics<arbitrary>], iteration_bounds = array<i64: 1>, scalar_prefetch = 0 : i64, scratch_operands = 0 : i64, tpu.core_type = #tpu.core_type<tc>, window_params = [{pipeline_mode = #tpu.pipeline_mode<synchronous>, transform_indices = @transform_0, window_bounds = array<i64: 8, 128>}, {pipeline_mode = #tpu.pipeline_mode<synchronous>, transform_indices = @transform_1, window_bounds = array<i64: 8, 128>}]} {
    %c0 = arith.constant 0 : index
    %c0_0 = arith.constant 0 : index
    %0 = vector.load %arg1[%c0, %c0_0] : memref<8x128xf32, #tpu.memory_space<vmem>>, vector<8x128xf32>
    %c0_1 = arith.constant 0 : index
    %c0_2 = arith.constant 0 : index
    %1 = vector.load %arg2[%c0_1, %c0_2] : memref<8x128xf32, #tpu.memory_space<vmem>>, vector<8x128xf32>
    tpu.vector_store %arg2[%c0_1, %c0_2], %0 {strides = array<i32>} : memref<8x128xf32, #tpu.memory_space<vmem>>, vector<8x128xf32>,
    return
  }
  func.func @transform_0(%arg0: i32) -> (i32, i32) {
    %c0_i32 = arith.constant 0 : i32
    %c0_i32_0 = arith.constant 0 : i32
    %c0_i32_1 = arith.constant 0 : i32
    return %c0_i32, %c0_i32_0 : i32, i32
  }
  func.func @transform_1(%arg0: i32) -> (i32, i32) {
    %c0_i32 = arith.constant 0 : i32
    %c0_i32_0 = arith.constant 0 : i32
    %c0_i32_1 = arith.constant 0 : i32
    return %c0_i32, %c0_i32_0 : i32, i32
  }
}

module attributes {stable_mosaic.version = 11 : i64} {
  func.func @_dense_residual_kernel_fused(%arg0: i32, %arg1: i32, %arg2: memref<8x128xf32, #tpu.memory_space<vmem>>, %arg3: memref<128x128xf32, #tpu.memory_space<vmem>>, %arg4: memref<1x128xf32, #tpu.memory_space<vmem>>, %arg5: memref<8x128xf32, #tpu.memory_space<vmem>>) attributes {dimension_semantics = [#tpu.dimension_semantics<parallel>, #tpu.dimension_semantics<parallel>], iteration_bounds = array<i64: 1, 1>, scalar_prefetch = 0 : i64, scratch_operands = 0 : i64, tpu.core_type = #tpu.core_type<tc>, window_params = [{transform_indices = @transform_0, window_bounds = array<i64: 8, 128>}, {transform_indices = @transform_1, window_bounds = array<i64: 128, 128>}, {transform_indices = @transform_2, window_bounds = array<i64: 1, 128>}, {transform_indices = @transform_3, window_bounds = array<i64: 8, 128>}]} {
    %c0 = arith.constant 0 : index
    %c0_0 = arith.constant 0 : index
    %0 = vector.load %arg2[%c0, %c0_0] : memref<8x128xf32, #tpu.memory_space<vmem>>, vector<8x128xf32>
    %c0_1 = arith.constant 0 : index
    %c0_2 = arith.constant 0 : index
    %1 = vector.load %arg3[%c0_1, %c0_2] : memref<128x128xf32, #tpu.memory_space<vmem>>, vector<128x128xf32>
    %cst = arith.constant dense<0.000000e+00> : vector<8x128xf32>
    %2 = tpu.matmul %0, %1, %cst {dimension_numbers = #tpu.dot_dimension_numbers<[1], [0], [0], [1], [0, 0, 1, 1], [], []>} : vector<8x128xf32>, vector<128x128xf32>, vector<8x128xf32> -> vector<8x128xf32>
    %c0_3 = arith.constant 0 : index
    %c0_4 = arith.constant 0 : index
    %3 = vector.load %arg4[%c0_3, %c0_4] : memref<1x128xf32, #tpu.memory_space<vmem>>, vector<1x128xf32>
    %4 = vector.broadcast %3 : vector<1x128xf32> to vector<8x128xf32>
    %5 = arith.addf %2, %4 : vector<8x128xf32>
    %6 = arith.addf %5, %0 : vector<8x128xf32>
    %c0_5 = arith.constant 0 : index
    %c0_6 = arith.constant 0 : index
    %7 = vector.load %arg5[%c0_5, %c0_6] : memref<8x128xf32, #tpu.memory_space<vmem>>, vector<8x128xf32>
    tpu.vector_store %arg5[%c0_5, %c0_6], %6 {strides = array<i32>} : memref<8x128xf32, #tpu.memory_space<vmem>>, vector<8x128xf32>,
    return
  }
  func.func @transform_0(%arg0: i32, %arg1: i32) -> (i32, i32) {
    %c0_i32 = arith.constant 0 : i32
    %c0_i32_0 = arith.constant 0 : i32
    return %arg1, %c0_i32 : i32, i32
  }
  func.func @transform_1(%arg0: i32, %arg1: i32) -> (i32, i32) {
    %c0_i32 = arith.constant 0 : i32
    %c0_i32_0 = arith.constant 0 : i32
    return %c0_i32, %arg0 : i32, i32
  }
  func.func @transform_2(%arg0: i32, %arg1: i32) -> (i32, i32) {
    %c0_i32 = arith.constant 0 : i32
    %c0_i32_0 = arith.constant 0 : i32
    return %c0_i32, %arg0 : i32, i32
  }
  func.func @transform_3(%arg0: i32, %arg1: i32) -> (i32, i32) {
    %c0_i32 = arith.constant 0 : i32
    return %arg1, %arg0 : i32, i32
  }
}

</mosaic_0001>

<llo_original>
// kernel: tpu_custom_call.1
$region0: #{tpu_custom_call.1}
  #allocation0 [shape = 'u32[]', space=smem, size = 0x4, offset = 0x4, fixed_abs, tag = 'smem constant byte address 0x4 - core index']
  #allocation1 [shape = 'u32[72,128]{1,0:T(1,128)}', space=vmem, size = 0x9000, scoped, tag = 'internal scratch']
  %s0 = inlined_call_operand.hbm [shape: f32[8,128], index: 0, kind: input, shape index: {}]
  %s1 = inlined_call_operand.hbm [shape: f32[8,128], index: 1, kind: output, shape index: {}]
  %s2 = sld [smem:[#allocation0]]
  $region18: #{tpu_custom_call.1} parent=0
    _
  %s4 = ssub.s32 1, %s2
  %s5 = scalar_select 0, %s4, %s2
  $region1: #{tpu_custom_call.1} parent=0
    #allocation2 [shape = 'u8[4096]{0}', space=vmem, size = 0x1000, scoped, tag = 'input window, operand 0, single buffered']
    #allocation3 [shape = 's32[1]{0}', space=sflag, size = 0x4, scoped, tag = 'scoped memory for tpu_custom_call.1']
    #allocation4 [shape = 's32[1]{0}', space=sflag, size = 0x4, scoped, tag = 'scoped memory for tpu_custom_call.1']
    #allocation5 [shape = 'u8[4096]{0}', space=vmem, size = 0x1000, scoped, tag = 'output window, operand 0, single buffered']
    %6 = vsyncpa [#allocation3], 0
    %7 = vsyncpa [#allocation4], 0
    // Predicated region
    $region2: #{tpu_custom_call.1} parent=1 // pred_check
      _
    $region3: #{tpu_custom_call.1} parent=1 // pred_check_branch
      %9 = sbr.rel (0) target = $region5
    $region4: #{tpu_custom_call.1} parent=1 // pred_region
      %11 = vsyncadd [#allocation3], 0
      %s13 = sshll.u32 %s0, 4
      %s14 = int_to_ptr.hbm [resolvable:$true] %s13
      %s15 = sshll.u32 [#allocation2], 4
      %s16 = int_to_ptr.vmem [resolvable:$true] %s15
      %18 = dma.hbm_to_vmem [thread:$0]  %s14, 128, %s16, [#allocation3]
    $region5: #{tpu_custom_call.1} parent=1 // pred_fallthru
      _
    // Predicated region
    $region6: #{tpu_custom_call.1} parent=1 // pred_check
      _
    $region7: #{tpu_custom_call.1} parent=1 // pred_check_branch
      %20 = sbr.rel (0) target = $region9
    $region8: #{tpu_custom_call.1} parent=1 // pred_region
      %22 = dma.done [#allocation3], 128
    $region9: #{tpu_custom_call.1} parent=1 // pred_fallthru
      _
    %v23 = vld [vmem:[#allocation2] sm:$0xff]
    %24 = vst [vmem:[#allocation5] sm:$0xff] %v23
    // Predicated region
    $region10: #{tpu_custom_call.1} parent=1 // pred_check
      _
    $region11: #{tpu_custom_call.1} parent=1 // pred_check_branch
      %26 = sbr.rel (0) target = $region13
    $region12: #{tpu_custom_call.1} parent=1 // pred_region
      %28 = vsyncadd [#allocation4], 0
      %s30 = sshll.u32 [#allocation5], 4
      %s31 = int_to_ptr.vmem [resolvable:$true] %s30
      %s32 = sshll.u32 %s1, 4
      %s33 = int_to_ptr.hbm [resolvable:$true] %s32
      %35 = dma.vmem_to_hbm [thread:$0]  %s31, 128, %s33, [#allocation4]
    $region13: #{tpu_custom_call.1} parent=1 // pred_fallthru
      _
    // Predicated region
    $region14: #{tpu_custom_call.1} parent=1 // pred_check
      _
    $region15: #{tpu_custom_call.1} parent=1 // pred_check_branch
      %37 = sbr.rel (0) target = $region17
    $region16: #{tpu_custom_call.1} parent=1 // pred_region
      %39 = dma.done [#allocation4], 128
    $region17: #{tpu_custom_call.1} parent=1 // pred_fallthru
      _
    %40 = vsyncpa [#allocation3], 1
    %41 = vsyncpa [#allocation4], 1

// kernel: _dense_residual_call.1
$region0: #{_dense_residual_call.1}
  #allocation0 [shape = 'u32[]', space=smem, size = 0x4, offset = 0x4, fixed_abs, tag = 'smem constant byte address 0x4 - core index']
  #allocation1 [shape = 'u32[72,128]{1,0:T(1,128)}', space=vmem, size = 0x9000, scoped, tag = 'internal scratch']
  %s0 = inlined_call_operand.vmem [shape: f32[8,128], index: 0, kind: input, shape index: {}]
  %s1 = inlined_call_operand.hbm [shape: f32[128,128], index: 1, kind: input, shape index: {}]
  %s2 = inlined_call_operand.vmem [shape: f32[1,128], index: 2, kind: input, shape index: {}]
  %s3 = inlined_call_operand.hbm [shape: f32[8,128], index: 3, kind: output, shape index: {}]
  %s4 = sld [smem:[#allocation0]]
  $region26: #{_dense_residual_call.1} parent=0
    _
  %s6 = ssub.s32 1, %s4
  %s7 = scalar_select 0, %s6, %s4
  $region1: #{_dense_residual_call.1} parent=0
    #allocation2 [shape = 'u8[65536]{0}', space=vmem, size = 0x10000, scoped, tag = 'input window, operand 1, single buffered']
    #allocation3 [shape = 's32[1]{0}', space=sflag, size = 0x4, scoped, tag = 'scoped memory for _dense_residual_call.1']
    #allocation4 [shape = 's32[1]{0}', space=sflag, size = 0x4, scoped, tag = 'scoped memory for _dense_residual_call.1']
    #allocation5 [shape = 'u8[4096]{0}', space=vmem, size = 0x1000, scoped, tag = 'output window, operand 0, single buffered']
    %8 = vsyncpa [#allocation3], 0
    %9 = vsyncpa [#allocation4], 0
    // Predicated region
    $region2: #{_dense_residual_call.1} parent=1 // pred_check
      _
    $region3: #{_dense_residual_call.1} parent=1 // pred_check_branch
      %11 = sbr.rel (0) target = $region5
    $region4: #{_dense_residual_call.1} parent=1 // pred_region
      _
    $region5: #{_dense_residual_call.1} parent=1 // pred_fallthru
      _
    // Predicated region
    $region6: #{_dense_residual_call.1} parent=1 // pred_check
      _
    $region7: #{_dense_residual_call.1} parent=1 // pred_check_branch
      %13 = sbr.rel (0) target = $region9
    $region8: #{_dense_residual_call.1} parent=1 // pred_region
      %15 = vsyncadd [#allocation3], 0
      %s16 = sshll.u32 %s1, 4
      %s17 = int_to_ptr.hbm [resolvable:$true] %s16
      %s18 = sshll.u32 [#allocation2], 4
      %s19 = int_to_ptr.vmem [resolvable:$true] %s18
      %24 = dma.hbm_to_vmem [thread:$0]  %s17, 2048, %s19, [#allocation3], 128, 128, 8
    $region9: #{_dense_residual_call.1} parent=1 // pred_fallthru
      _
    // Predicated region
    $region10: #{_dense_residual_call.1} parent=1 // pred_check
      _
    $region11: #{_dense_residual_call.1} parent=1 // pred_check_branch
      %26 = sbr.rel (0) target = $region13
    $region12: #{_dense_residual_call.1} parent=1 // pred_region
      _
    $region13: #{_dense_residual_call.1} parent=1 // pred_fallthru
      _
    // Predicated region
    $region14: #{_dense_residual_call.1} parent=1 // pred_check
      _
    $region15: #{_dense_residual_call.1} parent=1 // pred_check_branch
      %28 = sbr.rel (0) target = $region17
    $region16: #{_dense_residual_call.1} parent=1 // pred_region
      %30 = dma.done [#allocation3], 2048
    $region17: #{_dense_residual_call.1} parent=1 // pred_fallthru
      _
    %v31 = vld [vmem:[%s0] sm:$0xff]
    %v32 = vld [vmem:[#allocation2] sm:$0xff]
    %v33 = vld [vmem:[#allocation2 + $0x8] sm:$0xff]
    %v34 = vld [vmem:[#allocation2 + $0x10] sm:$0xff]
    %v35 = vld [vmem:[#allocation2 + $0x18] sm:$0xff]
    %v36 = vld [vmem:[#allocation2 + $0x20] sm:$0xff]
    %v37 = vld [vmem:[#allocation2 + $0x28] sm:$0xff]
    %v38 = vld [vmem:[#allocation2 + $0x30] sm:$0xff]
    %v39 = vld [vmem:[#allocation2 + $0x38] sm:$0xff]
    %v40 = vld [vmem:[#allocation2 + $0x40] sm:$0xff]
    %v41 = vld [vmem:[#allocation2 + $0x48] sm:$0xff]
    %v42 = vld [vmem:[#allocation2 + $0x50] sm:$0xff]
    %v43 = vld [vmem:[#allocation2 + $0x58] sm:$0xff]
    %v44 = vld [vmem:[#allocation2 + $0x60] sm:$0xff]
    %v45 = vld [vmem:[#allocation2 + $0x68] sm:$0xff]
    %v46 = vld [vmem:[#allocation2 + $0x70] sm:$0xff]
    %v47 = vld [vmem:[#allocation2 + $0x78] sm:$0xff]
    %v48 = vld [vmem:[%s2] sm:$0x1]
    %v50 = vperm.slane %v48, 0
    %52 = vmatpush.msra.mxu0 %v47
    %53 = vmatpush.msra.mxu0 %v46
    %54 = vmatpush.msra.mxu0 %v45
    %55 = vmatpush.msra.mxu0 %v44
    %56 = vmatpush.msra.mxu0 %v43
    %57 = vmatpush.msra.mxu0 %v42
    %58 = vmatpush.msra.mxu0 %v41
    %59 = vmatpush.msra.mxu0 %v40
    %60 = vmatpush.msra.mxu0 %v39
    %61 = vmatpush.msra.mxu0 %v38
    %62 = vmatpush.msra.mxu0 %v37
    %63 = vmatpush.msra.mxu0 %v36
    %64 = vmatpush.msra.mxu0 %v35
    %65 = vmatpush.msra.mxu0 %v34
    %66 = vmatpush.msra.mxu0 %v33
    %67 = vmatpush.msra.mxu0 %v32
    %68 = vmatmul.f32.gmra.mxu0 %v31
    %v69 = vpop.f32.mrf.mxu0
    %v70 = vadd.f32 %v50, %v69
    %71 = vdwg.mxu0
    %v72 = vadd.f32 %v70, %v31
    %73 = vst [vmem:[#allocation5] sm:$0xff] %v72
    // Predicated region
    $region18: #{_dense_residual_call.1} parent=1 // pred_check
      _
    $region19: #{_dense_residual_call.1} parent=1 // pred_check_branch
      %75 = sbr.rel (0) target = $region21
    $region20: #{_dense_residual_call.1} parent=1 // pred_region
      %77 = vsyncadd [#allocation4], 0
      %s79 = sshll.u32 [#allocation5], 4
      %s80 = int_to_ptr.vmem [resolvable:$true] %s79
      %s81 = sshll.u32 %s3, 4
      %s82 = int_to_ptr.hbm [resolvable:$true] %s81
      %84 = dma.vmem_to_hbm [thread:$0]  %s80, 128, %s82, [#allocation4]
    $region21: #{_dense_residual_call.1} parent=1 // pred_fallthru
      _
    // Predicated region
    $region22: #{_dense_residual_call.1} parent=1 // pred_check
      _
    $region23: #{_dense_residual_call.1} parent=1 // pred_check_branch
      %86 = sbr.rel (0) target = $region25
    $region24: #{_dense_residual_call.1} parent=1 // pred_region
      %88 = dma.done [#allocation4], 128
    $region25: #{_dense_residual_call.1} parent=1 // pred_fallthru
      _
    %89 = vsyncpa [#allocation3], 1
    %90 = vsyncpa [#allocation4], 1

</llo_original>
